<compile_context>
chip_gen: v5e
topology: v5e:2x2
jax: 0.10.0
libtpu: 0.0.40
codegen_flags: <defaults>
</compile_context>

<pallas_src>
import functools

import jax
import jax.numpy as jnp
from jax.experimental import pallas as pl
from jax.experimental.pallas import tpu as pltpu

LANE = 128      # TPU lane width; hidden dims zero-padded to this for lane-dense matmuls
OUT_PAD = 8     # actions padded 4 -> 8 output lanes (16x less f32 writeback than 128)


def _round_up(n, m):
    return ((n + m - 1) // m) * m


def dqn_kernel(x_ref, w_ref, b_ref, o_ref, *, k1, out_lanes):
    """Fused 3-layer MLP on one (TM, k1) row tile.

    w_ref packs [w1 (k1,128); w2 (128,128); w3 (128,128)] row-wise in bf16,
    b_ref is (3, 128) f32.  Hidden dims are zero-padded to 128 lanes; the final
    store keeps only the first `out_lanes` lanes (actions padded to 8).
    """
    r1 = k1              # 16
    r2 = r1 + LANE       # 144   (both multiples of 16 sublanes -> free bf16 views)
    r3 = r2 + LANE       # 272

    # In-kernel bf16 cast of the f32 input tile (rides the idle VPU slot).
    x = x_ref[...].astype(jnp.bfloat16)                      # (TM, k1)

    # layer 1 + ReLU (bf16 operands on MXU, f32 accumulate / elementwise)
    h1 = jnp.dot(x, w_ref[0:r1, :], preferred_element_type=jnp.float32)
    h1 = jnp.maximum(h1 + b_ref[0:1, :], 0.0)

    # layer 2 + ReLU
    h2 = jnp.dot(h1.astype(jnp.bfloat16), w_ref[r1:r2, :],
                 preferred_element_type=jnp.float32)
    h2 = jnp.maximum(h2 + b_ref[1:2, :], 0.0)

    # layer 3 (no activation); keep only the first out_lanes lanes for the store.
    out3 = jnp.dot(h2.astype(jnp.bfloat16), w_ref[r2:r3, :],
                   preferred_element_type=jnp.float32)
    o_ref[...] = (out3 + b_ref[2:3, :])[:, :out_lanes]


def init_dqn_params(key, n_inputs=16, n_actions=4, hidden=32):
    """torch.nn.Linear-style U(-1/sqrt(fan_in), +bound) init.

    Weights stored as (in_features, out_features) == torch W.T; biases (1, out).
    """
    def linear(k, fan_in, fan_out):
        kw, kb = jax.random.split(k)
        bound = 1.0 / (fan_in ** 0.5)
        w = jax.random.uniform(kw, (fan_in, fan_out), jnp.float32, -bound, bound)
        b = jax.random.uniform(kb, (1, fan_out), jnp.float32, -bound, bound)
        return w, b

    k1, k2, k3 = jax.random.split(key, 3)
    w1, b1 = linear(k1, n_inputs, hidden)
    w2, b2 = linear(k2, hidden, hidden)
    w3, b3 = linear(k3, hidden, n_actions)
    return (w1, b1, w2, b2, w3, b3)


def pack_dqn_params(raw_params, n_inputs=16):
    """Pack 6 tiny tensors into one bf16 weight slab + one f32 bias slab (2 DMAs).

    The first block's row count is padded up to a multiple of 16 so every slab
    slice in the kernel lands on a bf16 (16,128) tile boundary (free views).
    """
    w1, b1, w2, b2, w3, b3 = raw_params
    hidden = w1.shape[1]
    n_actions = w3.shape[1]
    assert n_actions <= OUT_PAD, "raise OUT_PAD for more actions"
    k1 = _round_up(n_inputs, 16)

    w1p = jnp.zeros((k1, LANE), jnp.float32).at[:n_inputs, :hidden].set(w1)
    w2p = jnp.zeros((LANE, LANE), jnp.float32).at[:hidden, :hidden].set(w2)
    w3p = jnp.zeros((LANE, LANE), jnp.float32).at[:hidden, :n_actions].set(w3)
    w_slab = jnp.concatenate([w1p, w2p, w3p], axis=0).astype(jnp.bfloat16)  # (272,128)

    b1p = jnp.zeros((1, LANE), jnp.float32).at[:, :hidden].set(b1)
    b2p = jnp.zeros((1, LANE), jnp.float32).at[:, :hidden].set(b2)
    b3p = jnp.zeros((1, LANE), jnp.float32).at[:, :n_actions].set(b3)
    b_slab = jnp.concatenate([b1p, b2p, b3p], axis=0)                        # (3,128) f32

    return w_slab, b_slab, n_actions, n_inputs, k1


def _choose_tile(B, block_m):
    """Row-tile size: multiple of 8, <= block_m, >= ~4 tiles for megacore, and
    re-balanced so batch padding waste stays small (decoupled from block_m)."""
    block_m = max(8, _round_up(block_m, 8))
    tm = min(block_m, _round_up(max(pl.cdiv(B, 4), 1), 8))   # aim for >= 4 tiles
    tm = max(tm, 8)
    n_tiles = pl.cdiv(B, tm)
    tm = min(_round_up(pl.cdiv(B, n_tiles), 8), block_m)     # re-balance -> less pad
    n_tiles = pl.cdiv(B, tm)
    return tm, n_tiles, n_tiles * tm


def dqn_forward(x, packed_params, *, block_m=4096):
    """x: (B, ...) flattened to (B, n_inputs). Returns (B, n_actions) f32."""
    w_slab, b_slab, n_actions, n_inputs, k1 = packed_params
    B = x.shape[0]
    x2d = x.reshape(B, -1)                       # matches x.view(x.shape[0], -1)
    assert x2d.shape[1] == n_inputs, (x2d.shape, n_inputs)

    tm, n_tiles, b_pad = _choose_tile(B, block_m)

    # Pad rows to the (small, re-balanced) grid extent and cols to the 16-aligned
    # slab K; input stays f32 — bf16 cast happens inside the kernel.
    if b_pad != B or k1 != n_inputs:
        x2d = jnp.pad(x2d, ((0, b_pad - B), (0, k1 - n_inputs)))

    kernel = functools.partial(dqn_kernel, k1=k1, out_lanes=OUT_PAD)

    flops = 2 * b_pad * (k1 + LANE + LANE) * LANE
    bytes_accessed = (b_pad * (k1 * 4 + OUT_PAD * 4)
                      + w_slab.size * 2 + b_slab.size * 4)

    out = pl.pallas_call(
        kernel,
        out_shape=jax.ShapeDtypeStruct((b_pad, OUT_PAD), jnp.float32),
        grid_spec=pltpu.PrefetchScalarGridSpec(
            num_scalar_prefetch=0,
            grid=(n_tiles,),
            in_specs=[
                pl.BlockSpec((tm, k1), lambda i: (i, 0)),     # row tile of x (f32)
                pl.BlockSpec(w_slab.shape, lambda i: (0, 0)),  # resident weights
                pl.BlockSpec(b_slab.shape, lambda i: (0, 0)),  # resident biases
            ],
            out_specs=pl.BlockSpec((tm, OUT_PAD), lambda i: (i, 0)),
        ),
        compiler_params=pltpu.CompilerParams(
            dimension_semantics=("parallel",),        # megacore sharding on v7x
            vmem_limit_bytes=32 * 1024 * 1024,        # ~10 MiB used at TM=4096
        ),
        cost_estimate=pl.CostEstimate(
            flops=flops, transcendentals=0, bytes_accessed=bytes_accessed),
    )(x2d, w_slab, b_slab)

    return out[:B, :n_actions]


def dqn_reference(x, raw_params):
    """Pure-JAX reference with matching bf16-operand / f32-accumulate precision."""
    w1, b1, w2, b2, w3, b3 = raw_params
    x2d = x.reshape(x.shape[0], -1).astype(jnp.bfloat16)
    h1 = jnp.maximum(
        jnp.dot(x2d, w1.astype(jnp.bfloat16),
                preferred_element_type=jnp.float32) + b1, 0.0)
    h2 = jnp.maximum(
        jnp.dot(h1.astype(jnp.bfloat16), w2.astype(jnp.bfloat16),
                preferred_element_type=jnp.float32) + b2, 0.0)
    return jnp.dot(h2.astype(jnp.bfloat16), w3.astype(jnp.bfloat16),
                   preferred_element_type=jnp.float32) + b3


if __name__ == "__main__":
    key = jax.random.PRNGKey(0)
    kx, kp, kx2 = jax.random.split(key, 3)

    raw_params = init_dqn_params(kp, n_inputs=16, n_actions=4, hidden=32)
    packed = pack_dqn_params(raw_params, n_inputs=16)

    # Case 1: tiny batch, (2, 4, 4) flattened to (2, 16); exercises row padding.
    x = jax.random.normal(kx, (2, 4, 4), dtype=jnp.float32)
    out = jax.block_until_ready(dqn_forward(x, packed))
    ref = dqn_reference(x, raw_params)
    assert out.shape == (2, 4), out.shape
    assert jnp.allclose(out, ref, atol=1e-3, rtol=1e-3), "mismatch vs reference (B=2)"

    # Case 2: multi-tile batch with a ragged tail (small block_m) to exercise the
    # batch-grid pipeline and the adaptive tile / padding path.
    x2 = jax.random.normal(kx2, (37, 16), dtype=jnp.float32)
    out2 = jax.block_until_ready(dqn_forward(x2, packed, block_m=16))
    ref2 = dqn_reference(x2, raw_params)
    assert out2.shape == (37, 4), out2.shape
    assert jnp.allclose(out2, ref2, atol=1e-3, rtol=1e-3), "mismatch vs reference (B=37)"

    print("KERNEL_OK")
</pallas_src>

<mosaic_0001>
module attributes {stable_mosaic.version = 11 : i64} {
  func.func @dqn_kernel(%arg0: i32, %arg1: memref<8x16xf32, #tpu.memory_space<vmem>>, %arg2: memref<272x128xbf16, #tpu.memory_space<vmem>>, %arg3: memref<3x128xf32, #tpu.memory_space<vmem>>, %arg4: memref<8x8xf32, #tpu.memory_space<vmem>>) attributes {dimension_semantics = [#tpu.dimension_semantics<parallel>], iteration_bounds = array<i64: 1>, scalar_prefetch = 0 : i64, scratch_operands = 0 : i64, tpu.core_type = #tpu.core_type<tc>, window_params = [{transform_indices = @transform_0, window_bounds = array<i64: 8, 16>}, {pipeline_mode = #tpu.pipeline_mode<synchronous>, transform_indices = @transform_1, window_bounds = array<i64: 272, 128>}, {pipeline_mode = #tpu.pipeline_mode<synchronous>, transform_indices = @transform_2, window_bounds = array<i64: 3, 128>}, {transform_indices = @transform_3, window_bounds = array<i64: 8, 8>}]} {
    %c0 = arith.constant 0 : index
    %c0_0 = arith.constant 0 : index
    %0 = vector.load %arg1[%c0, %c0_0] : memref<8x16xf32, #tpu.memory_space<vmem>>, vector<8x16xf32>
    %1 = arith.truncf %0 : vector<8x16xf32> to vector<8x16xbf16>
    %c0_1 = arith.constant 0 : index
    %c0_2 = arith.constant 0 : index
    %2 = vector.load %arg2[%c0_1, %c0_2] : memref<272x128xbf16, #tpu.memory_space<vmem>>, vector<16x128xbf16>
    %cst = arith.constant dense<0.000000e+00> : vector<8x128xf32>
    %3 = tpu.matmul %1, %2, %cst {dimension_numbers = #tpu.dot_dimension_numbers<[1], [0], [0], [1], [0, 0, 1, 1], [], []>} : vector<8x16xbf16>, vector<16x128xbf16>, vector<8x128xf32> -> vector<8x128xf32>
    %c0_3 = arith.constant 0 : index
    %c0_4 = arith.constant 0 : index
    %4 = vector.load %arg3[%c0_3, %c0_4] : memref<3x128xf32, #tpu.memory_space<vmem>>, vector<1x128xf32>
    %5 = vector.broadcast %4 : vector<1x128xf32> to vector<8x128xf32>
    %6 = arith.addf %3, %5 : vector<8x128xf32>
    %cst_5 = arith.constant 0.000000e+00 : f32
    %7 = vector.broadcast %cst_5 : f32 to vector<8x128xf32>
    %8 = arith.maximumf %6, %7 : vector<8x128xf32>
    %9 = arith.truncf %8 : vector<8x128xf32> to vector<8x128xbf16>
    %c16 = arith.constant 16 : index
    %c0_6 = arith.constant 0 : index
    %10 = vector.load %arg2[%c16, %c0_6] : memref<272x128xbf16, #tpu.memory_space<vmem>>, vector<128x128xbf16>
    %cst_7 = arith.constant dense<0.000000e+00> : vector<8x128xf32>
    %11 = tpu.matmul %9, %10, %cst_7 {dimension_numbers = #tpu.dot_dimension_numbers<[1], [0], [0], [1], [0, 0, 1, 1], [], []>} : vector<8x128xbf16>, vector<128x128xbf16>, vector<8x128xf32> -> vector<8x128xf32>
    %c1 = arith.constant 1 : index
    %c0_8 = arith.constant 0 : index
    %12 = vector.load %arg3[%c1, %c0_8] : memref<3x128xf32, #tpu.memory_space<vmem>>, vector<1x128xf32>
    %13 = vector.broadcast %12 : vector<1x128xf32> to vector<8x128xf32>
    %14 = arith.addf %11, %13 : vector<8x128xf32>
    %cst_9 = arith.constant 0.000000e+00 : f32
    %15 = vector.broadcast %cst_9 : f32 to vector<8x128xf32>
    %16 = arith.maximumf %14, %15 : vector<8x128xf32>
    %17 = arith.truncf %16 : vector<8x128xf32> to vector<8x128xbf16>
    %c144 = arith.constant 144 : index
    %c0_10 = arith.constant 0 : index
    %18 = vector.load %arg2[%c144, %c0_10] : memref<272x128xbf16, #tpu.memory_space<vmem>>, vector<128x128xbf16>
    %cst_11 = arith.constant dense<0.000000e+00> : vector<8x128xf32>
    %19 = tpu.matmul %17, %18, %cst_11 {dimension_numbers = #tpu.dot_dimension_numbers<[1], [0], [0], [1], [0, 0, 1, 1], [], []>} : vector<8x128xbf16>, vector<128x128xbf16>, vector<8x128xf32> -> vector<8x128xf32>
    %c2 = arith.constant 2 : index
    %c0_12 = arith.constant 0 : index
    %20 = vector.load %arg3[%c2, %c0_12] : memref<3x128xf32, #tpu.memory_space<vmem>>, vector<1x128xf32>
    %21 = vector.broadcast %20 : vector<1x128xf32> to vector<8x128xf32>
    %22 = arith.addf %19, %21 : vector<8x128xf32>
    %23 = vector.extract_strided_slice %22 {offsets = [0, 0], sizes = [8, 8], strides = [1, 1]} : vector<8x128xf32> to vector<8x8xf32>
    %c0_13 = arith.constant 0 : index
    %c0_14 = arith.constant 0 : index
    %24 = vector.load %arg4[%c0_13, %c0_14] : memref<8x8xf32, #tpu.memory_space<vmem>>, vector<8x8xf32>
    tpu.vector_store %arg4[%c0_13, %c0_14], %23 {strides = array<i32>} : memref<8x8xf32, #tpu.memory_space<vmem>>, vector<8x8xf32>,
    return
  }
  func.func @transform_0(%arg0: i32) -> (i32, i32) {
    %c0_i32 = arith.constant 0 : i32
    %c0_i32_0 = arith.constant 0 : i32
    return %arg0, %c0_i32 : i32, i32
  }
  func.func @transform_1(%arg0: i32) -> (i32, i32) {
    %c0_i32 = arith.constant 0 : i32
    %c0_i32_0 = arith.constant 0 : i32
    %c0_i32_1 = arith.constant 0 : i32
    return %c0_i32, %c0_i32_0 : i32, i32
  }
  func.func @transform_2(%arg0: i32) -> (i32, i32) {
    %c0_i32 = arith.constant 0 : i32
    %c0_i32_0 = arith.constant 0 : i32
    %c0_i32_1 = arith.constant 0 : i32
    return %c0_i32, %c0_i32_0 : i32, i32
  }
  func.func @transform_3(%arg0: i32) -> (i32, i32) {
    %c0_i32 = arith.constant 0 : i32
    %c0_i32_0 = arith.constant 0 : i32
    return %arg0, %c0_i32 : i32, i32
  }
}

</mosaic_0001>

<llo_original>
// kernel: tpu_custom_call.1
$region0: #{tpu_custom_call.1}
  #allocation0 [shape = 'u32[]', space=smem, size = 0x4, offset = 0x4, fixed_abs, tag = 'smem constant byte address 0x4 - core index']
  #allocation1 [shape = 'u32[72,128]{1,0:T(1,128)}', space=vmem, size = 0x9000, scoped, tag = 'internal scratch']
  %s0 = inlined_call_operand.hbm [shape: f32[8,16], index: 0, kind: input, shape index: {}]
  %s1 = inlined_call_operand.hbm [shape: bf16[272,128], index: 1, kind: input, shape index: {}]
  %s2 = inlined_call_operand.hbm [shape: f32[3,128], index: 2, kind: input, shape index: {}]
  %s3 = inlined_call_operand.hbm [shape: f32[8,8], index: 3, kind: output, shape index: {}]
  %s4 = sld [smem:[#allocation0]]
  $region34: #{tpu_custom_call.1} parent=0
    _
  %s6 = ssub.s32 1, %s4
  %s7 = scalar_select 0, %s6, %s4
  $region1: #{tpu_custom_call.1} parent=0
    #allocation2 [shape = 'u8[4096]{0}', space=vmem, size = 0x1000, scoped, tag = 'input window, operand 0, single buffered']
    #allocation3 [shape = 's32[1]{0}', space=sflag, size = 0x4, scoped, tag = 'scoped memory for tpu_custom_call.1']
    #allocation4 [shape = 's32[1]{0}', space=sflag, size = 0x4, scoped, tag = 'scoped memory for tpu_custom_call.1']
    #allocation5 [shape = 'u8[69632]{0}', space=vmem, size = 0x11000, scoped, tag = 'input window, operand 1, single buffered']
    #allocation6 [shape = 's32[1]{0}', space=sflag, size = 0x4, scoped, tag = 'scoped memory for tpu_custom_call.1']
    #allocation7 [shape = 'u8[2048]{0}', space=vmem, size = 0x800, scoped, tag = 'input window, operand 2, single buffered']
    #allocation8 [shape = 'u8[4096]{0}', space=vmem, size = 0x1000, scoped, tag = 'output window, operand 0, single buffered']
    %8 = vsyncpa [#allocation3], 0
    %9 = vsyncpa [#allocation6], 0
    %10 = vsyncpa [#allocation4], 0
    // Predicated region
    $region2: #{tpu_custom_call.1} parent=1 // pred_check
      _
    $region3: #{tpu_custom_call.1} parent=1 // pred_check_branch
      %12 = sbr.rel (0) target = $region5
    $region4: #{tpu_custom_call.1} parent=1 // pred_region
      %14 = vsyncadd [#allocation3], 0
      %s16 = sshll.u32 %s0, 4
      %s17 = int_to_ptr.hbm [resolvable:$true] %s16
      %s18 = sshll.u32 [#allocation2], 4
      %s19 = int_to_ptr.vmem [resolvable:$true] %s18
      %21 = dma.hbm_to_vmem [thread:$0]  %s17, 128, %s19, [#allocation3]
    $region5: #{tpu_custom_call.1} parent=1 // pred_fallthru
      _
    // Predicated region
    $region6: #{tpu_custom_call.1} parent=1 // pred_check
      _
    $region7: #{tpu_custom_call.1} parent=1 // pred_check_branch
      %23 = sbr.rel (0) target = $region9
    $region8: #{tpu_custom_call.1} parent=1 // pred_region
      %25 = vsyncadd [#allocation6], 0
      %s26 = sshll.u32 %s1, 4
      %s27 = int_to_ptr.hbm [resolvable:$true] %s26
      %s28 = sshll.u32 [#allocation5], 4
      %s29 = int_to_ptr.vmem [resolvable:$true] %s28
      %34 = dma.hbm_to_vmem [thread:$0]  %s27, 2176, %s29, [#allocation6], 64, 64, 4
    $region9: #{tpu_custom_call.1} parent=1 // pred_fallthru
      _
    // Predicated region
    $region10: #{tpu_custom_call.1} parent=1 // pred_check
      _
    $region11: #{tpu_custom_call.1} parent=1 // pred_check_branch
      %36 = sbr.rel (0) target = $region13
    $region12: #{tpu_custom_call.1} parent=1 // pred_region
      %38 = vsyncadd [#allocation6], 0
      %s40 = sshll.u32 %s2, 4
      %s41 = int_to_ptr.hbm [resolvable:$true] %s40
      %s42 = sshll.u32 [#allocation7], 4
      %s43 = int_to_ptr.vmem [resolvable:$true] %s42
      %45 = dma.hbm_to_vmem [thread:$0]  %s41, 64, %s43, [#allocation6]
    $region13: #{tpu_custom_call.1} parent=1 // pred_fallthru
      _
    // Predicated region
    $region14: #{tpu_custom_call.1} parent=1 // pred_check
      _
    $region15: #{tpu_custom_call.1} parent=1 // pred_check_branch
      %47 = sbr.rel (0) target = $region17
    $region16: #{tpu_custom_call.1} parent=1 // pred_region
      %49 = dma.done [#allocation3], 128
    $region17: #{tpu_custom_call.1} parent=1 // pred_fallthru
      _
    // Predicated region
    $region18: #{tpu_custom_call.1} parent=1 // pred_check
      _
    $region19: #{tpu_custom_call.1} parent=1 // pred_check_branch
      %51 = sbr.rel (0) target = $region21
    $region20: #{tpu_custom_call.1} parent=1 // pred_region
      %53 = dma.done [#allocation6], 2176
    $region21: #{tpu_custom_call.1} parent=1 // pred_fallthru
      _
    // Predicated region
    $region22: #{tpu_custom_call.1} parent=1 // pred_check
      _
    $region23: #{tpu_custom_call.1} parent=1 // pred_check_branch
      %55 = sbr.rel (0) target = $region25
    $region24: #{tpu_custom_call.1} parent=1 // pred_region
      %57 = dma.done [#allocation6], 64
    $region25: #{tpu_custom_call.1} parent=1 // pred_fallthru
      _
    %v59 = vld [vmem:[#allocation2] sm:$0xff]
    %v60 = vpack.c.bf16 %v59, %v59
    %v61 = vld [vmem:[#allocation5] sm:$0xf]
    %v62 = vld [vmem:[#allocation5 + $0x4] sm:$0xf]
    %v63 = vld [vmem:[#allocation7] sm:$0x1]
    %v64 = vperm.slane %v63, 0
    %v67 = vunpack.c.l.b16 %v61
    %v68 = vunpack.c.l.b16 %v62
    %v69 = vpack.c.b16 %v68, %v67
    %vm71 = vcmask 130048
    %v73 = vsel %vm71, %v60, 0
    %75 = vmatpush.bf16.msra.mxu0 0
    %76 = vmatpush.bf16.msra.mxu0 0
    %77 = vmatpush.bf16.msra.mxu0 0
    %78 = vmatpush.bf16.msra.mxu0 0
    %79 = vmatpush.bf16.msra.mxu0 0
    %80 = vmatpush.bf16.msra.mxu0 0
    %81 = vmatpush.bf16.msra.mxu0 0
    %82 = vmatpush.bf16.msra.mxu0 %v69
    %83 = vmatmul.bf16.gmra.mxu0 %v73
    %v84 = vpop.f32.mrf.mxu0
    %v85 = vadd.f32 %v64, %v84
    %v86 = vpop.f32.mrf.mxu0
    %87 = vdwg.mxu0
    %v88 = vmax.f32 %v85, 0.0
    %v89 = vpack.c.bf16 %v88, %v88
    %v90 = vld [vmem:[#allocation5 + $0x8] sm:$0xf]
    %v91 = vld [vmem:[#allocation5 + $0xc] sm:$0xf]
    %v92 = vld [vmem:[#allocation5 + $0x10] sm:$0xf]
    %v93 = vld [vmem:[#allocation5 + $0x14] sm:$0xf]
    %v94 = vld [vmem:[#allocation5 + $0x18] sm:$0xf]
    %v95 = vld [vmem:[#allocation5 + $0x1c] sm:$0xf]
    %v96 = vld [vmem:[#allocation5 + $0x20] sm:$0xf]
    %v97 = vld [vmem:[#allocation5 + $0x24] sm:$0xf]
    %v98 = vld [vmem:[#allocation5 + $0x28] sm:$0xf]
    %v99 = vld [vmem:[#allocation5 + $0x2c] sm:$0xf]
    %v100 = vld [vmem:[#allocation5 + $0x30] sm:$0xf]
    %v101 = vld [vmem:[#allocation5 + $0x34] sm:$0xf]
    %v102 = vld [vmem:[#allocation5 + $0x38] sm:$0xf]
    %v103 = vld [vmem:[#allocation5 + $0x3c] sm:$0xf]
    %v104 = vld [vmem:[#allocation5 + $0x40] sm:$0xf]
    %v105 = vld [vmem:[#allocation5 + $0x44] sm:$0xf]
    %v106 = vld [vmem:[#allocation7 + $0x1] sm:$0x1]
    %v107 = vperm.slane %v106, 0
    %v124 = vunpack.c.l.b16 %v90
    %v125 = vunpack.c.l.b16 %v91
    %v126 = vunpack.c.l.b16 %v92
    %v127 = vunpack.c.l.b16 %v93
    %v128 = vunpack.c.l.b16 %v94
    %v129 = vunpack.c.l.b16 %v95
    %v130 = vunpack.c.l.b16 %v96
    %v131 = vunpack.c.l.b16 %v97
    %v132 = vunpack.c.l.b16 %v98
    %v133 = vunpack.c.l.b16 %v99
    %v134 = vunpack.c.l.b16 %v100
    %v135 = vunpack.c.l.b16 %v101
    %v136 = vunpack.c.l.b16 %v102
    %v137 = vunpack.c.l.b16 %v103
    %v138 = vunpack.c.l.b16 %v104
    %v139 = vunpack.c.l.b16 %v105
    %v140 = vpack.c.b16 %v125, %v124
    %v141 = vpack.c.b16 %v127, %v126
    %v142 = vpack.c.b16 %v129, %v128
    %v143 = vpack.c.b16 %v131, %v130
    %v144 = vpack.c.b16 %v133, %v132
    %v145 = vpack.c.b16 %v135, %v134
    %v146 = vpack.c.b16 %v137, %v136
    %v147 = vpack.c.b16 %v139, %v138
    %156 = vmatpush.bf16.msra.mxu0 %v147
    %157 = vmatpush.bf16.msra.mxu0 %v146
    %158 = vmatpush.bf16.msra.mxu0 %v145
    %159 = vmatpush.bf16.msra.mxu0 %v144
    %160 = vmatpush.bf16.msra.mxu0 %v143
    %161 = vmatpush.bf16.msra.mxu0 %v142
    %162 = vmatpush.bf16.msra.mxu0 %v141
    %163 = vmatpush.bf16.msra.mxu0 %v140
    %164 = vmatmul.bf16.gmra.mxu0 %v89
    %v165 = vpop.f32.mrf.mxu0
    %v166 = vadd.f32 %v107, %v165
    %v167 = vpop.f32.mrf.mxu0
    %168 = vdwg.mxu0
    %v169 = vmax.f32 %v166, 0.0
    %v170 = vpack.c.bf16 %v169, %v169
    %v171 = vld [vmem:[#allocation5 + $0x48] sm:$0xf]
    %v172 = vld [vmem:[#allocation5 + $0x4c] sm:$0xf]
    %v173 = vld [vmem:[#allocation5 + $0x50] sm:$0xf]
    %v174 = vld [vmem:[#allocation5 + $0x54] sm:$0xf]
    %v175 = vld [vmem:[#allocation5 + $0x58] sm:$0xf]
    %v176 = vld [vmem:[#allocation5 + $0x5c] sm:$0xf]
    %v177 = vld [vmem:[#allocation5 + $0x60] sm:$0xf]
    %v178 = vld [vmem:[#allocation5 + $0x64] sm:$0xf]
    %v179 = vld [vmem:[#allocation5 + $0x68] sm:$0xf]
    %v180 = vld [vmem:[#allocation5 + $0x6c] sm:$0xf]
    %v181 = vld [vmem:[#allocation5 + $0x70] sm:$0xf]
    %v182 = vld [vmem:[#allocation5 + $0x74] sm:$0xf]
    %v183 = vld [vmem:[#allocation5 + $0x78] sm:$0xf]
    %v184 = vld [vmem:[#allocation5 + $0x7c] sm:$0xf]
    %v185 = vld [vmem:[#allocation5 + $0x80] sm:$0xf]
    %v186 = vld [vmem:[#allocation5 + $0x84] sm:$0xf]
    %v187 = vld [vmem:[#allocation7 + $0x2] sm:$0x1]
    %v188 = vperm.slane %v187, 0
    %v205 = vunpack.c.l.b16 %v171
    %v206 = vunpack.c.l.b16 %v172
    %v207 = vunpack.c.l.b16 %v173
    %v208 = vunpack.c.l.b16 %v174
    %v209 = vunpack.c.l.b16 %v175
    %v210 = vunpack.c.l.b16 %v176
    %v211 = vunpack.c.l.b16 %v177
    %v212 = vunpack.c.l.b16 %v178
    %v213 = vunpack.c.l.b16 %v179
    %v214 = vunpack.c.l.b16 %v180
    %v215 = vunpack.c.l.b16 %v181
    %v216 = vunpack.c.l.b16 %v182
    %v217 = vunpack.c.l.b16 %v183
    %v218 = vunpack.c.l.b16 %v184
    %v219 = vunpack.c.l.b16 %v185
    %v220 = vunpack.c.l.b16 %v186
    %v221 = vpack.c.b16 %v206, %v205
    %v222 = vpack.c.b16 %v208, %v207
    %v223 = vpack.c.b16 %v210, %v209
    %v224 = vpack.c.b16 %v212, %v211
    %v225 = vpack.c.b16 %v214, %v213
    %v226 = vpack.c.b16 %v216, %v215
    %v227 = vpack.c.b16 %v218, %v217
    %v228 = vpack.c.b16 %v220, %v219
    %237 = vmatpush.bf16.msra.mxu0 %v228
    %238 = vmatpush.bf16.msra.mxu0 %v227
    %239 = vmatpush.bf16.msra.mxu0 %v226
    %240 = vmatpush.bf16.msra.mxu0 %v225
    %241 = vmatpush.bf16.msra.mxu0 %v224
    %242 = vmatpush.bf16.msra.mxu0 %v223
    %243 = vmatpush.bf16.msra.mxu0 %v222
    %244 = vmatpush.bf16.msra.mxu0 %v221
    %245 = vmatmul.bf16.gmra.mxu0 %v170
    %v246 = vpop.f32.mrf.mxu0
    %v247 = vadd.f32 %v188, %v246
    %v248 = vpop.f32.mrf.mxu0
    %249 = vdwg.mxu0
    %vm250 = vcmask 64512
    %251 = vst.msk [vmem:[#allocation8] sm:$0xff] %vm250, %v247
    // Predicated region
    $region26: #{tpu_custom_call.1} parent=1 // pred_check
      _
    $region27: #{tpu_custom_call.1} parent=1 // pred_check_branch
      %253 = sbr.rel (0) target = $region29
    $region28: #{tpu_custom_call.1} parent=1 // pred_region
      %255 = vsyncadd [#allocation4], 0
      %s257 = sshll.u32 [#allocation8], 4
      %s258 = int_to_ptr.vmem [resolvable:$true] %s257
      %s259 = sshll.u32 %s3, 4
      %s260 = int_to_ptr.hbm [resolvable:$true] %s259
      %262 = dma.vmem_to_hbm [thread:$0]  %s258, 128, %s260, [#allocation4]
    $region29: #{tpu_custom_call.1} parent=1 // pred_fallthru
      _
    // Predicated region
    $region30: #{tpu_custom_call.1} parent=1 // pred_check
      _
    $region31: #{tpu_custom_call.1} parent=1 // pred_check_branch
      %264 = sbr.rel (0) target = $region33
    $region32: #{tpu_custom_call.1} parent=1 // pred_region
      %266 = dma.done [#allocation4], 128
    $region33: #{tpu_custom_call.1} parent=1 // pred_fallthru
      _
    %267 = vsyncpa [#allocation3], 1
    %268 = vsyncpa [#allocation6], 1
    %269 = vsyncpa [#allocation4], 1

</llo_original>
